<compile_context>
chip_gen: v7x
topology: tpu7x:2x2x1
jax: 0.10.0
libtpu: 0.0.40
codegen_flags: <defaults>
</compile_context>

<pallas_src>
import jax
import jax.numpy as jnp
from jax import lax
from jax.experimental import pallas as pl
from jax.experimental.pallas import tpu as pltpu

_LANES = 128
_SUBLANES = 8


def _sublane_multiple(*dtypes):
    """Row-count multiple so the block respects sublane packing for each dtype."""
    m = _SUBLANES
    for dt in dtypes:
        itemsize = max(1, jnp.dtype(dt).itemsize)
        m = max(m, _SUBLANES * max(1, 4 // itemsize))  # f32->8, bf16->16, int8->32
    return m


def _tile_config():
    # 8192 rows = 4 MiB per f32 input block; 2 inputs x 2 pipeline buffers
    # = 16 MiB, safely under the 32 MiB scoped-VMEM default on every generation.
    block_rows = 8192
    vmem_limit = 32 * 1024 * 1024
    try:
        vmem_cap = getattr(pltpu.get_tpu_info(), "vmem_capacity_bytes", None)
        if vmem_cap is not None and vmem_cap > 0:
            if vmem_cap >= 96 * 1024 * 1024:
                # v5e / v6e: 128 MiB physical VMEM -> 8 MiB input blocks.
                block_rows, vmem_limit = 16384, 48 * 1024 * 1024
            else:
                # v7x: 64 MiB per TensorCore -> same block, capped scoped VMEM.
                block_rows, vmem_limit = 16384, 40 * 1024 * 1024
    except Exception:
        pass  # conservative defaults above are valid on every generation
    return block_rows, vmem_limit


def _make_dice_partials_kernel(block_rows, num_blocks, last_block_valid):
    block_elems = block_rows * _LANES
    r = block_rows // _SUBLANES

    def _fold_and_store(x_ref, t_ref, out_ref, mask):
        x = x_ref[...].astype(jnp.float32)
        t = t_ref[...].astype(jnp.float32)
        s = jax.nn.sigmoid(x)  # single EUP-class transcendental per element
        if mask is not None:
            s = jnp.where(mask, s, 0.0)
            t = jnp.where(mask, t, 0.0)
        # Fold to vreg-shaped (8,128) partials with elementwise VPU adds only;
        # the reshape keeps the native (8,128) tile intact (no cross-lane work).
        inter_p = jnp.sum((s * t).reshape(r, _SUBLANES, _LANES), axis=0)
        s_p = jnp.sum(s.reshape(r, _SUBLANES, _LANES), axis=0)
        t_p = jnp.sum(t.reshape(r, _SUBLANES, _LANES), axis=0)
        # Direct lane-dense one-vreg stores into sublane slices (no concat).
        out_ref[0, 0:_SUBLANES, :] = inter_p
        out_ref[0, _SUBLANES:2 * _SUBLANES, :] = s_p
        out_ref[0, 2 * _SUBLANES:3 * _SUBLANES, :] = t_p

    def kernel(x_ref, t_ref, out_ref):
        if last_block_valid == block_elems:
            # Element count is block-aligned: no masking anywhere.
            _fold_and_store(x_ref, t_ref, out_ref, None)
        else:
            is_last = pl.program_id(0) == num_blocks - 1

            @pl.when(jnp.logical_not(is_last))
            def _():
                _fold_and_store(x_ref, t_ref, out_ref, None)

            @pl.when(is_last)
            def _():
                row = lax.broadcasted_iota(jnp.int32, (block_rows, _LANES), 0)
                lane = lax.broadcasted_iota(jnp.int32, (block_rows, _LANES), 1)
                mask = (row * _LANES + lane) < last_block_valid
                _fold_and_store(x_ref, t_ref, out_ref, mask)

    return kernel


def dice_loss(inputs, targets, smooth=1.0):
    """DiceLoss forward on TPU. inputs = logits, targets = same shape. f32 scalar."""
    assert inputs.shape == targets.shape
    total = int(inputs.size)
    if total == 0:
        return jnp.float32(0.0)

    x = inputs.reshape(-1)
    t = targets.reshape(-1)

    # Lane-dense layout. Only when the element count isn't a multiple of 128 do
    # we zero-pad (those elements are masked in-kernel); block alignment is
    # handled entirely by the in-kernel tail mask, NOT by wrapper concatenates.
    rem = total % _LANES
    if rem:
        x = jnp.pad(x, (0, _LANES - rem))
        t = jnp.pad(t, (0, _LANES - rem))
    total_rows = (total + _LANES - 1) // _LANES

    max_rows, vmem_limit = _tile_config()
    row_mult = _sublane_multiple(x.dtype, t.dtype)
    block_rows = min(max_rows, ((total_rows + row_mult - 1) // row_mult) * row_mult)
    block_elems = block_rows * _LANES
    num_blocks = (total_rows + block_rows - 1) // block_rows
    last_block_valid = total - (num_blocks - 1) * block_elems

    x2 = x.reshape(total_rows, _LANES)
    t2 = t.reshape(total_rows, _LANES)

    kernel = _make_dice_partials_kernel(block_rows, num_blocks, last_block_valid)

    partials = pl.pallas_call(
        kernel,
        out_shape=jax.ShapeDtypeStruct((num_blocks, 3 * _SUBLANES, _LANES), jnp.float32),
        grid_spec=pltpu.PrefetchScalarGridSpec(
            num_scalar_prefetch=0,
            grid=(num_blocks,),
            in_specs=[
                pl.BlockSpec((block_rows, _LANES), lambda i: (i, 0)),
                pl.BlockSpec((block_rows, _LANES), lambda i: (i, 0)),
            ],
            out_specs=pl.BlockSpec((1, 3 * _SUBLANES, _LANES), lambda i: (i, 0, 0)),
        ),
        compiler_params=pltpu.CompilerParams(
            dimension_semantics=("parallel",),
            vmem_limit_bytes=vmem_limit,
        ),
    )(x2, t2)

    intersection = jnp.sum(partials[:, 0:_SUBLANES, :])
    inputs_sum = jnp.sum(partials[:, _SUBLANES:2 * _SUBLANES, :])
    targets_sum = jnp.sum(partials[:, 2 * _SUBLANES:3 * _SUBLANES, :])

    dice = (2.0 * intersection + smooth) / (inputs_sum + targets_sum + smooth)
    return (1.0 - dice).astype(jnp.float32)


def _reference(inputs, targets, smooth=1.0):
    x = inputs.reshape(-1).astype(jnp.float32)
    t = targets.reshape(-1).astype(jnp.float32)
    s = jax.nn.sigmoid(x)
    intersection = jnp.sum(s * t)
    dice = (2.0 * intersection + smooth) / (jnp.sum(s) + jnp.sum(t) + smooth)
    return 1.0 - dice


if __name__ == "__main__":
    key = jax.random.PRNGKey(0)
    k1, k2, k3, k4 = jax.random.split(key, 4)

    # Case 1: segmentation-style logits/targets, 128-aligned element count.
    N, C, H, W = 2, 4, 16, 16
    logits = jax.random.normal(k1, (N, C, H, W), dtype=jnp.float32)
    targets = (jax.random.uniform(k2, (N, C, H, W)) > 0.5).astype(jnp.float32)
    loss = dice_loss(logits, targets, smooth=1.0)
    jax.block_until_ready(loss)
    ref = _reference(logits, targets, 1.0)
    assert jnp.allclose(loss, ref, rtol=1e-5, atol=1e-5), (loss, ref)

    # Case 2: non-128-aligned element count (exercises the in-kernel tail mask).
    logits2 = jax.random.normal(k3, (2, 3, 7, 9), dtype=jnp.float32)
    targets2 = (jax.random.uniform(k4, (2, 3, 7, 9)) > 0.5).astype(jnp.float32)
    loss2 = dice_loss(logits2, targets2, smooth=1.0)
    jax.block_until_ready(loss2)
    ref2 = _reference(logits2, targets2, 1.0)
    assert jnp.allclose(loss2, ref2, rtol=1e-5, atol=1e-5), (loss2, ref2)

    print("KERNEL_OK")
</pallas_src>

<mosaic_0001>
module attributes {stable_mosaic.version = 11 : i64} {
  func.func @kernel(%arg0: i32, %arg1: memref<16x128xf32, #tpu.memory_space<vmem>>, %arg2: memref<16x128xf32, #tpu.memory_space<vmem>>, %arg3: memref<1x24x128xf32, #tpu.memory_space<vmem>>) attributes {dimension_semantics = [#tpu.dimension_semantics<parallel>], iteration_bounds = array<i64: 1>, scalar_prefetch = 0 : i64, scratch_operands = 0 : i64, tpu.core_type = #tpu.core_type<tc>, window_params = [{transform_indices = @transform_0, window_bounds = array<i64: 16, 128>}, {transform_indices = @transform_1, window_bounds = array<i64: 16, 128>}, {transform_indices = @transform_2, window_bounds = array<i64: 1, 24, 128>}]} {
    %c0 = arith.constant 0 : index
    %c0_0 = arith.constant 0 : index
    %0 = vector.load %arg1[%c0, %c0_0] : memref<16x128xf32, #tpu.memory_space<vmem>>, vector<16x128xf32>
    %c0_1 = arith.constant 0 : index
    %c0_2 = arith.constant 0 : index
    %1 = vector.load %arg2[%c0_1, %c0_2] : memref<16x128xf32, #tpu.memory_space<vmem>>, vector<16x128xf32>
    %2 = arith.negf %0 : vector<16x128xf32>
    %3 = math.exp %2 : vector<16x128xf32>
    %cst = arith.constant 1.000000e+00 : f32
    %4 = vector.broadcast %cst : f32 to vector<16x128xf32>
    %5 = arith.addf %4, %3 : vector<16x128xf32>
    %6 = arith.divf %4, %5 : vector<16x128xf32>
    %7 = arith.mulf %6, %1 : vector<16x128xf32>
    %8 = vector.shape_cast %7 : vector<16x128xf32> to vector<2x8x128xf32>
    %cst_3 = arith.constant dense<0.000000e+00> : vector<8x128xf32>
    %9 = vector.multi_reduction <add>, %8, %cst_3 [0] : vector<2x8x128xf32> to vector<8x128xf32>
    %10 = vector.shape_cast %6 : vector<16x128xf32> to vector<2x8x128xf32>
    %cst_4 = arith.constant dense<0.000000e+00> : vector<8x128xf32>
    %11 = vector.multi_reduction <add>, %10, %cst_4 [0] : vector<2x8x128xf32> to vector<8x128xf32>
    %12 = vector.shape_cast %1 : vector<16x128xf32> to vector<2x8x128xf32>
    %cst_5 = arith.constant dense<0.000000e+00> : vector<8x128xf32>
    %13 = vector.multi_reduction <add>, %12, %cst_5 [0] : vector<2x8x128xf32> to vector<8x128xf32>
    %c0_6 = arith.constant 0 : index
    %c0_7 = arith.constant 0 : index
    %c0_8 = arith.constant 0 : index
    %14 = vector.load %arg3[%c0_6, %c0_7, %c0_8] : memref<1x24x128xf32, #tpu.memory_space<vmem>>, vector<1x8x128xf32>
    %15 = vector.shape_cast %14 : vector<1x8x128xf32> to vector<8x128xf32>
    %16 = vector.shape_cast %9 : vector<8x128xf32> to vector<1x8x128xf32>
    tpu.vector_store %arg3[%c0_6, %c0_7, %c0_8], %16 {strides = array<i32>} : memref<1x24x128xf32, #tpu.memory_space<vmem>>, vector<1x8x128xf32>,
    %c0_9 = arith.constant 0 : index
    %c8 = arith.constant 8 : index
    %c0_10 = arith.constant 0 : index
    %17 = vector.load %arg3[%c0_9, %c8, %c0_10] : memref<1x24x128xf32, #tpu.memory_space<vmem>>, vector<1x8x128xf32>
    %18 = vector.shape_cast %17 : vector<1x8x128xf32> to vector<8x128xf32>
    %19 = vector.shape_cast %11 : vector<8x128xf32> to vector<1x8x128xf32>
    tpu.vector_store %arg3[%c0_9, %c8, %c0_10], %19 {strides = array<i32>} : memref<1x24x128xf32, #tpu.memory_space<vmem>>, vector<1x8x128xf32>,
    %c0_11 = arith.constant 0 : index
    %c16 = arith.constant 16 : index
    %c0_12 = arith.constant 0 : index
    %20 = vector.load %arg3[%c0_11, %c16, %c0_12] : memref<1x24x128xf32, #tpu.memory_space<vmem>>, vector<1x8x128xf32>
    %21 = vector.shape_cast %20 : vector<1x8x128xf32> to vector<8x128xf32>
    %22 = vector.shape_cast %13 : vector<8x128xf32> to vector<1x8x128xf32>
    tpu.vector_store %arg3[%c0_11, %c16, %c0_12], %22 {strides = array<i32>} : memref<1x24x128xf32, #tpu.memory_space<vmem>>, vector<1x8x128xf32>,
    return
  }
  func.func @transform_0(%arg0: i32) -> (i32, i32) {
    %c0_i32 = arith.constant 0 : i32
    %c0_i32_0 = arith.constant 0 : i32
    return %arg0, %c0_i32 : i32, i32
  }
  func.func @transform_1(%arg0: i32) -> (i32, i32) {
    %c0_i32 = arith.constant 0 : i32
    %c0_i32_0 = arith.constant 0 : i32
    return %arg0, %c0_i32 : i32, i32
  }
  func.func @transform_2(%arg0: i32) -> (i32, i32, i32) {
    %c0_i32 = arith.constant 0 : i32
    %c0_i32_0 = arith.constant 0 : i32
    %c0_i32_1 = arith.constant 0 : i32
    return %arg0, %c0_i32, %c0_i32_0 : i32, i32, i32
  }
}

</mosaic_0001>

<llo_original>
// kernel: tpu_custom_call.1
$region0: #{tpu_custom_call.1}
  #allocation0 [shape = 'u32[]', space=smem, size = 0x4, offset = 0x4, fixed_abs, tag = 'smem constant byte address 0x4 - core index']
  #allocation1 [shape = 'u32[144,128]{1,0:T(1,128)}', space=vmem, size = 0x12000, scoped, tag = 'internal scratch']
  %s0 = inlined_call_operand.hbm [shape: f32[16,128], index: 0, kind: input, shape index: {}]
  %s1 = inlined_call_operand.hbm [shape: f32[16,128], index: 1, kind: input, shape index: {}]
  %s2 = inlined_call_operand.hbm [shape: f32[1,24,128], index: 2, kind: output, shape index: {}]
  %s3 = sld [smem:[#allocation0]]
  $region26: #{tpu_custom_call.1} parent=0
    _
  %s5 = ssub.s32 1, %s3
  %s6 = scalar_select 0, %s5, %s3
  $region1: #{tpu_custom_call.1} parent=0
    #allocation2 [shape = 'u8[8192]{0}', space=vmem, size = 0x2000, scoped, tag = 'input window, operand 0, single buffered']
    #allocation3 [shape = 's32[1]{0}', space=sflag, size = 0x4, scoped, tag = 'scoped memory for tpu_custom_call.1']
    #allocation4 [shape = 's32[1]{0}', space=sflag, size = 0x4, scoped, tag = 'scoped memory for tpu_custom_call.1']
    #allocation5 [shape = 'u8[8192]{0}', space=vmem, size = 0x2000, scoped, tag = 'input window, operand 1, single buffered']
    #allocation6 [shape = 's32[1]{0}', space=sflag, size = 0x4, scoped, tag = 'scoped memory for tpu_custom_call.1']
    #allocation7 [shape = 'u8[12288]{0}', space=vmem, size = 0x3000, scoped, tag = 'output window, operand 0, single buffered']
    %7 = vsyncpa [#allocation3], 0
    %8 = vsyncpa [#allocation6], 0
    %9 = vsyncpa [#allocation4], 0
    // Predicated region
    $region2: #{tpu_custom_call.1} parent=1 // pred_check
      _
    $region3: #{tpu_custom_call.1} parent=1 // pred_check_branch
      %11 = sbr.rel (0) target = $region5
    $region4: #{tpu_custom_call.1} parent=1 // pred_region
      %s13 = ssub.s32 256, 256
      %14 = vsyncadd [#allocation3], %s13
      %s15 = sshll.u32 [#allocation2], 4
      %s16 = int_to_ptr.vmem [resolvable:$true] %s15
      %21 = dma.hbm_to_vmem [thread:$0]  %s0, 256, %s16, [#allocation3], 128, 128, 8
    $region5: #{tpu_custom_call.1} parent=1 // pred_fallthru
      _
    // Predicated region
    $region6: #{tpu_custom_call.1} parent=1 // pred_check
      _
    $region7: #{tpu_custom_call.1} parent=1 // pred_check_branch
      %23 = sbr.rel (0) target = $region9
    $region8: #{tpu_custom_call.1} parent=1 // pred_region
      %s25 = ssub.s32 256, 256
      %26 = vsyncadd [#allocation6], %s25
      %s27 = sshll.u32 [#allocation5], 4
      %s28 = int_to_ptr.vmem [resolvable:$true] %s27
      %33 = dma.hbm_to_vmem [thread:$0]  %s1, 256, %s28, [#allocation6], 128, 128, 8
    $region9: #{tpu_custom_call.1} parent=1 // pred_fallthru
      _
    // Predicated region
    $region10: #{tpu_custom_call.1} parent=1 // pred_check
      _
    $region11: #{tpu_custom_call.1} parent=1 // pred_check_branch
      %35 = sbr.rel (0) target = $region13
    $region12: #{tpu_custom_call.1} parent=1 // pred_region
      %36 = dma.done [#allocation3], 256
    $region13: #{tpu_custom_call.1} parent=1 // pred_fallthru
      _
    // Predicated region
    $region14: #{tpu_custom_call.1} parent=1 // pred_check
      _
    $region15: #{tpu_custom_call.1} parent=1 // pred_check_branch
      %38 = sbr.rel (0) target = $region17
    $region16: #{tpu_custom_call.1} parent=1 // pred_region
      %39 = dma.done [#allocation6], 256
    $region17: #{tpu_custom_call.1} parent=1 // pred_fallthru
      _
    %v40 = vld [vmem:[#allocation2] sm:$0xff]
    %v41 = vld [vmem:[#allocation2 + $0x8] sm:$0xff]
    %v42 = vld [vmem:[#allocation5] sm:$0xff]
    %v43 = vld [vmem:[#allocation5 + $0x8] sm:$0xff]
    %v44 = vxor.u32 %v40, 2147483648
    %v45 = vxor.u32 %v41, 2147483648
    %v46 = vmul.f32 %v44, 1.442695
    %v47 = vpow.pop %v46
    %v48 = vmul.f32 %v45, 1.442695
    %v49 = vpow.pop %v48
    %v50 = vadd.f32 %v47, 1.0
    %v51 = vadd.f32 %v49, 1.0
    %v52 = vrcp.pop %v50
    %v53 = vmul.f32 1.0, %v52
    %v54 = vrcp.pop %v51
    %v55 = vmul.f32 1.0, %v54
    %v56 = vmul.f32 %v53, %v42
    %v57 = vmul.f32 %v55, %v43
    %v58 = vadd.f32 %v56, %v57
    %v59 = vadd.f32 %v53, %v55
    %v60 = vadd.f32 %v42, %v43
    %61 = vst [vmem:[#allocation7] sm:$0xff] %v58
    %62 = vst [vmem:[#allocation7 + $0x8] sm:$0xff] %v59
    %63 = vst [vmem:[#allocation7 + $0x10] sm:$0xff] %v60
    // Predicated region
    $region18: #{tpu_custom_call.1} parent=1 // pred_check
      _
    $region19: #{tpu_custom_call.1} parent=1 // pred_check_branch
      %65 = sbr.rel (0) target = $region21
    $region20: #{tpu_custom_call.1} parent=1 // pred_region
      %s67 = ssub.s32 384, 384
      %68 = vsyncadd [#allocation4], %s67
      %s69 = sshll.u32 [#allocation7], 4
      %s70 = int_to_ptr.vmem [resolvable:$true] %s69
      %75 = dma.vmem_to_hbm [thread:$0]  %s70, 384, %s2, [#allocation4], 128, 128, 8
    $region21: #{tpu_custom_call.1} parent=1 // pred_fallthru
      _
    // Predicated region
    $region22: #{tpu_custom_call.1} parent=1 // pred_check
      _
    $region23: #{tpu_custom_call.1} parent=1 // pred_check_branch
      %77 = sbr.rel (0) target = $region25
    $region24: #{tpu_custom_call.1} parent=1 // pred_region
      %78 = dma.done [#allocation4], 384
    $region25: #{tpu_custom_call.1} parent=1 // pred_fallthru
      _
    %79 = vsyncpa [#allocation3], 1
    %80 = vsyncpa [#allocation6], 1
    %81 = vsyncpa [#allocation4], 1

</llo_original>
